<compile_context>
chip_gen: v7x
topology: tpu7x:2x2x1
jax: 0.10.0
libtpu: 0.0.40
codegen_flags: <defaults>
</compile_context>

<pallas_src>
import jax
import jax.numpy as jnp
from jax import lax
from jax.experimental import pallas as pl
from jax.experimental.pallas import tpu as pltpu


def attention_layer_kernel(feat_ref, cent_ref, logits_ref, w_ref, b_ref,
                           out_ref):
    # w_ref: (2F, L) = [Wq^T ; Wk^T] stacked on sublanes; b_ref: (2, L) = [bq ; bk].
    F = w_ref.shape[0] // 2

    # Static sublane-offset slices (F is a multiple of 8) — free, no XLU work.
    wq = w_ref[0:F, :]
    wk = w_ref[F:, :]
    bq = b_ref[0:1, :]
    bk = b_ref[1:2, :]

    # Projections (MXU, f32 accumulation).
    q = jnp.dot(feat_ref[...], wq, preferred_element_type=jnp.float32) + bq   # (N, L)
    k = jnp.dot(cent_ref[...], wk, preferred_element_type=jnp.float32) + bk   # (M, L)

    # scores = q @ k^T without materializing k^T: contract latent axis of both.
    scores = lax.dot_general(
        q, k,
        dimension_numbers=(((1,), (1,)), ((), ())),
        preferred_element_type=jnp.float32)                                   # (N, M)

    # Row-wise, numerically stable softmax (dim=1).
    m = jnp.max(scores, axis=1, keepdims=True)
    e = jnp.exp(scores - m)
    denom = jnp.sum(e, axis=1, keepdims=True)
    weight = e * pl.reciprocal(denom, approx=False)   # exact: keeps 1e-5 tolerance

    # NOTE: M=8 => lane-sparse stores here; lane-dense batching only applies at
    # larger call granularity (see header comments).
    out_ref[...] = (weight * logits_ref[...]).astype(out_ref.dtype)


def pack_attention_params(wq_t, bq, wk_t, bk):
    """One-time parameter packing — call at init, NOT per forward call.

    Stacks along the sublane (row) axis so the kernel takes free static Ref
    views instead of lane-offset slices.
    """
    w_packed = jnp.concatenate([wq_t, wk_t], axis=0)   # (2F, L)
    b_packed = jnp.concatenate([bq, bk], axis=0)       # (2, L)
    return w_packed, b_packed


def attention_layer(features, centroids, logits, w_packed, b_packed):
    """features:(N,F) centroids:(M,F) logits:(N,M) w_packed:(2F,L) b_packed:(2,L)."""
    N, F = features.shape
    M, _ = centroids.shape
    L = w_packed.shape[1]

    flops = 2 * N * F * L + 2 * M * F * L + 2 * N * L * M
    bytes_accessed = 4 * (N * F + M * F + N * M          # features, centroids, logits
                          + 2 * F * L + 2 * L            # packed weights / biases
                          + N * M)                        # output
    cost = pl.CostEstimate(flops=flops,
                           transcendentals=N * M,         # exp in softmax
                           bytes_accessed=bytes_accessed)

    # Single grid point: everything fits comfortably in VMEM at these shapes.
    return pl.pallas_call(
        attention_layer_kernel,
        out_shape=jax.ShapeDtypeStruct((N, M), jnp.float32),
        in_specs=[
            pl.BlockSpec(memory_space=pltpu.MemorySpace.VMEM),  # features
            pl.BlockSpec(memory_space=pltpu.MemorySpace.VMEM),  # centroids
            pl.BlockSpec(memory_space=pltpu.MemorySpace.VMEM),  # logits
            pl.BlockSpec(memory_space=pltpu.MemorySpace.VMEM),  # [Wq^T ; Wk^T]
            pl.BlockSpec(memory_space=pltpu.MemorySpace.VMEM),  # [bq ; bk]
        ],
        out_specs=pl.BlockSpec(memory_space=pltpu.MemorySpace.VMEM),
        cost_estimate=cost,
    )(features, centroids, logits, w_packed, b_packed)


if __name__ == "__main__":
    # Small shapes consistent with the module: feat_dim=32 -> latent_dim=8.
    N, M, FEAT = 16, 8, 32
    LATENT = FEAT // 4

    key = jax.random.PRNGKey(0)
    k_feat, k_cent, k_log, k_wq, k_bq, k_wk, k_bk = jax.random.split(key, 7)

    features = jax.random.normal(k_feat, (N, FEAT), dtype=jnp.float32)
    centroids = jax.random.normal(k_cent, (M, FEAT), dtype=jnp.float32)
    logits = jax.random.normal(k_log, (N, M), dtype=jnp.float32)

    # nn.Linear-style init; weights stored pre-transposed as (feat, latent).
    bound = 1.0 / jnp.sqrt(FEAT)
    wq_t = jax.random.uniform(k_wq, (FEAT, LATENT), jnp.float32, -bound, bound)
    bq = jax.random.uniform(k_bq, (1, LATENT), jnp.float32, -bound, bound)
    wk_t = jax.random.uniform(k_wk, (FEAT, LATENT), jnp.float32, -bound, bound)
    bk = jax.random.uniform(k_bk, (1, LATENT), jnp.float32, -bound, bound)

    # One-time packing at parameter init — NOT in the per-call path.
    w_packed, b_packed = pack_attention_params(wq_t, bq, wk_t, bk)
    w_packed, b_packed = jax.block_until_ready((w_packed, b_packed))

    out = attention_layer(features, centroids, logits, w_packed, b_packed)
    out = jax.block_until_ready(out)

    # Pure-JAX reference check.
    q_ref = features @ wq_t + bq
    k_ref = centroids @ wk_t + bk
    s_ref = q_ref @ k_ref.T
    w_ref = jax.nn.softmax(s_ref, axis=1)
    ref = w_ref * logits
    assert jnp.allclose(out, ref, atol=1e-5, rtol=1e-5), "mismatch vs reference"

    print("KERNEL_OK")
</pallas_src>

<mosaic_0001>
module attributes {stable_mosaic.version = 11 : i64} {
  func.func @attention_layer_kernel(%arg0: memref<16x32xf32, #tpu.memory_space<vmem>>, %arg1: memref<8x32xf32, #tpu.memory_space<vmem>>, %arg2: memref<16x8xf32, #tpu.memory_space<vmem>>, %arg3: memref<64x8xf32, #tpu.memory_space<vmem>>, %arg4: memref<2x8xf32, #tpu.memory_space<vmem>>, %arg5: memref<16x8xf32, #tpu.memory_space<vmem>>) attributes {dimension_semantics = [], scalar_prefetch = 0 : i64, scratch_operands = 0 : i64, tpu.core_type = #tpu.core_type<tc>} {
    %c0 = arith.constant 0 : index
    %c0_0 = arith.constant 0 : index
    %0 = vector.load %arg3[%c0, %c0_0] : memref<64x8xf32, #tpu.memory_space<vmem>>, vector<32x8xf32>
    %c32 = arith.constant 32 : index
    %c0_1 = arith.constant 0 : index
    %1 = vector.load %arg3[%c32, %c0_1] : memref<64x8xf32, #tpu.memory_space<vmem>>, vector<32x8xf32>
    %c0_2 = arith.constant 0 : index
    %c0_3 = arith.constant 0 : index
    %2 = vector.load %arg4[%c0_2, %c0_3] : memref<2x8xf32, #tpu.memory_space<vmem>>, vector<1x8xf32>
    %c1 = arith.constant 1 : index
    %c0_4 = arith.constant 0 : index
    %3 = vector.load %arg4[%c1, %c0_4] : memref<2x8xf32, #tpu.memory_space<vmem>>, vector<1x8xf32>
    %c0_5 = arith.constant 0 : index
    %c0_6 = arith.constant 0 : index
    %4 = vector.load %arg0[%c0_5, %c0_6] : memref<16x32xf32, #tpu.memory_space<vmem>>, vector<16x32xf32>
    %cst = arith.constant dense<0.000000e+00> : vector<16x8xf32>
    %5 = tpu.matmul %4, %0, %cst {dimension_numbers = #tpu.dot_dimension_numbers<[1], [0], [0], [1], [0, 0, 1, 1], [], []>} : vector<16x32xf32>, vector<32x8xf32>, vector<16x8xf32> -> vector<16x8xf32>
    %6 = vector.broadcast %2 : vector<1x8xf32> to vector<16x8xf32>
    %7 = arith.addf %5, %6 : vector<16x8xf32>
    %c0_7 = arith.constant 0 : index
    %c0_8 = arith.constant 0 : index
    %8 = vector.load %arg1[%c0_7, %c0_8] : memref<8x32xf32, #tpu.memory_space<vmem>>, vector<8x32xf32>
    %cst_9 = arith.constant dense<0.000000e+00> : vector<8x8xf32>
    %9 = tpu.matmul %8, %1, %cst_9 {dimension_numbers = #tpu.dot_dimension_numbers<[1], [0], [0], [1], [0, 0, 1, 1], [], []>} : vector<8x32xf32>, vector<32x8xf32>, vector<8x8xf32> -> vector<8x8xf32>
    %10 = vector.broadcast %3 : vector<1x8xf32> to vector<8x8xf32>
    %11 = arith.addf %9, %10 : vector<8x8xf32>
    %cst_10 = arith.constant dense<0.000000e+00> : vector<16x8xf32>
    %12 = tpu.matmul %7, %11, %cst_10 {dimension_numbers = #tpu.dot_dimension_numbers<[1], [1], [0], [0], [0, 0, 1, 0], [], []>} : vector<16x8xf32>, vector<8x8xf32>, vector<16x8xf32> -> vector<16x8xf32>
    %cst_11 = arith.constant dense<0xFF800000> : vector<16xf32>
    %13 = vector.multi_reduction <maximumf>, %12, %cst_11 [1] : vector<16x8xf32> to vector<16xf32>
    %14 = vector.shape_cast %13 : vector<16xf32> to vector<16x1xf32>
    %15 = vector.broadcast %14 : vector<16x1xf32> to vector<16x8xf32>
    %16 = arith.subf %12, %15 : vector<16x8xf32>
    %17 = math.exp %16 : vector<16x8xf32>
    %cst_12 = arith.constant dense<0.000000e+00> : vector<16xf32>
    %18 = vector.multi_reduction <add>, %17, %cst_12 [1] : vector<16x8xf32> to vector<16xf32>
    %19 = vector.shape_cast %18 : vector<16xf32> to vector<16x1xf32>
    %20 = tpu.reciprocal %19 : vector<16x1xf32> -> vector<16x1xf32>
    %21 = vector.broadcast %20 : vector<16x1xf32> to vector<16x8xf32>
    %22 = arith.mulf %17, %21 : vector<16x8xf32>
    %c0_13 = arith.constant 0 : index
    %c0_14 = arith.constant 0 : index
    %23 = vector.load %arg2[%c0_13, %c0_14] : memref<16x8xf32, #tpu.memory_space<vmem>>, vector<16x8xf32>
    %24 = arith.mulf %22, %23 : vector<16x8xf32>
    %c0_15 = arith.constant 0 : index
    %c0_16 = arith.constant 0 : index
    %25 = vector.load %arg5[%c0_15, %c0_16] : memref<16x8xf32, #tpu.memory_space<vmem>>, vector<16x8xf32>
    tpu.vector_store %arg5[%c0_15, %c0_16], %24 {strides = array<i32>} : memref<16x8xf32, #tpu.memory_space<vmem>>, vector<16x8xf32>,
    return
  }
}

</mosaic_0001>

<llo_original>
// kernel: tpu_custom_call.1
$region0: #{tpu_custom_call.1}
  #allocation0 [shape = 'u32[]', space=smem, size = 0x4, offset = 0x4, fixed_abs, tag = 'smem constant byte address 0x4 - core index']
  #allocation1 [shape = 'u32[144,128]{1,0:T(1,128)}', space=vmem, size = 0x12000, scoped, tag = 'internal scratch']
  %s0 = inlined_call_operand.vmem [shape: f32[16,32], index: 0, kind: input, shape index: {}]
  %s1 = inlined_call_operand.vmem [shape: f32[8,32], index: 1, kind: input, shape index: {}]
  %s2 = inlined_call_operand.vmem [shape: f32[16,8], index: 2, kind: input, shape index: {}]
  %s3 = inlined_call_operand.vmem [shape: f32[64,8], index: 3, kind: input, shape index: {}]
  %s4 = inlined_call_operand.vmem [shape: f32[2,8], index: 4, kind: input, shape index: {}]
  %s5 = inlined_call_operand.vmem [shape: f32[16,8], index: 5, kind: output, shape index: {}]
  %s6 = sld [smem:[#allocation0]]
  $region30: #{tpu_custom_call.1} parent=0
    _
  %s8 = ssub.s32 1, %s6
  %s9 = scalar_select 0, %s8, %s6
  // Predicated region
  $region2: #{tpu_custom_call.1} parent=0 // pred_check
    _
  $region3: #{tpu_custom_call.1} parent=0 // pred_check_branch
    %11 = sbr.rel (0) target = $region5
  $region4: #{tpu_custom_call.1} parent=0 // pred_region
    _
  $region5: #{tpu_custom_call.1} parent=0 // pred_fallthru
    _
  // Predicated region
  $region6: #{tpu_custom_call.1} parent=0 // pred_check
    _
  $region7: #{tpu_custom_call.1} parent=0 // pred_check_branch
    %13 = sbr.rel (0) target = $region9
  $region8: #{tpu_custom_call.1} parent=0 // pred_region
    _
  $region9: #{tpu_custom_call.1} parent=0 // pred_fallthru
    _
  // Predicated region
  $region10: #{tpu_custom_call.1} parent=0 // pred_check
    _
  $region11: #{tpu_custom_call.1} parent=0 // pred_check_branch
    %15 = sbr.rel (0) target = $region13
  $region12: #{tpu_custom_call.1} parent=0 // pred_region
    _
  $region13: #{tpu_custom_call.1} parent=0 // pred_fallthru
    _
  // Predicated region
  $region14: #{tpu_custom_call.1} parent=0 // pred_check
    _
  $region15: #{tpu_custom_call.1} parent=0 // pred_check_branch
    %17 = sbr.rel (0) target = $region17
  $region16: #{tpu_custom_call.1} parent=0 // pred_region
    _
  $region17: #{tpu_custom_call.1} parent=0 // pred_fallthru
    _
  // Predicated region
  $region18: #{tpu_custom_call.1} parent=0 // pred_check
    _
  $region19: #{tpu_custom_call.1} parent=0 // pred_check_branch
    %19 = sbr.rel (0) target = $region21
  $region20: #{tpu_custom_call.1} parent=0 // pred_region
    _
  $region21: #{tpu_custom_call.1} parent=0 // pred_fallthru
    _
  %v20 = vld [vmem:[%s3] sm:$0xff]
  %v21 = vld [vmem:[%s3 + $0x8] sm:$0xff]
  %v22 = vld [vmem:[%s3 + $0x10] sm:$0xff]
  %v23 = vld [vmem:[%s3 + $0x18] sm:$0xff]
  %v24 = vld [vmem:[%s3 + $0x20] sm:$0xff]
  %v25 = vld [vmem:[%s3 + $0x28] sm:$0xff]
  %v26 = vld [vmem:[%s3 + $0x30] sm:$0xff]
  %v27 = vld [vmem:[%s3 + $0x38] sm:$0xff]
  %v28 = vld [vmem:[%s4] sm:$0x1]
  %v29 = vld [vmem:[%s4 + $0x1] sm:$0x1]
  %v30 = vld [vmem:[%s0] sm:$0xff]
  %v31 = vld [vmem:[%s0 + $0x8] sm:$0xff]
  %v32 = vlaneseq
  %v33 = vshrl.u32 %v32, 7
  %v34 = vsub.s32 0, %v33
  %v35 = vrot.slane %v28, %v34
  %vm36 = vcmask 261120
  %v38 = vsel %vm36, %v30, 0
  %v41 = vsel %vm36, %v31, 0
  %43 = vmatprep.subr.mxu0 0.0
  %44 = vmatpush1.msra.mxu0 %v20
  %45 = vmatprep.subr.mxu0 0.0
  %46 = vmatpush1.msra.mxu0 %v21
  %47 = vmatprep.subr.mxu0 0.0
  %48 = vmatpush1.msra.mxu0 %v22
  %49 = vmatprep.subr.mxu0 0.0
  %50 = vmatpush1.msra.mxu0 %v23
  %51 = vmatprep.subr.mxu0 0.0
  %52 = vmatpush1.msra.mxu0 0.0
  %53 = vmatprep.subr.mxu0 0.0
  %54 = vmatpush1.msra.mxu0 0.0
  %55 = vmatprep.subr.mxu0 0.0
  %56 = vmatpush1.msra.mxu0 0.0
  %57 = vmatprep.subr.mxu0 0.0
  %58 = vmatpush1.msra.mxu0 0.0
  %59 = vmatprep.subr.mxu0 0.0
  %60 = vmatpush1.msra.mxu0 0.0
  %61 = vmatprep.subr.mxu0 0.0
  %62 = vmatpush1.msra.mxu0 0.0
  %63 = vmatprep.subr.mxu0 0.0
  %64 = vmatpush1.msra.mxu0 0.0
  %65 = vmatprep.subr.mxu0 0.0
  %66 = vmatpush1.msra.mxu0 0.0
  %67 = vmatprep.subr.mxu0 0.0
  %68 = vmatpush1.msra.mxu0 0.0
  %69 = vmatprep.subr.mxu0 0.0
  %70 = vmatpush1.msra.mxu0 0.0
  %71 = vmatprep.subr.mxu0 0.0
  %72 = vmatpush1.msra.mxu0 0.0
  %73 = vmatprep.subr.mxu0 0.0
  %74 = vmatpush1.msra.mxu0 0.0
  %75 = vmatprep.subr.mxu0 0.0
  %76 = vmatpush1.msra.mxu0 0.0
  %77 = vmatprep.subr.mxu0 0.0
  %78 = vmatpush1.msra.mxu0 0.0
  %79 = vmatprep.subr.mxu0 0.0
  %80 = vmatpush1.msra.mxu0 0.0
  %81 = vmatprep.subr.mxu0 0.0
  %82 = vmatpush1.msra.mxu0 0.0
  %83 = vmatprep.subr.mxu0 0.0
  %84 = vmatpush1.msra.mxu0 0.0
  %85 = vmatprep.subr.mxu0 0.0
  %86 = vmatpush1.msra.mxu0 0.0
  %87 = vmatprep.subr.mxu0 0.0
  %88 = vmatpush1.msra.mxu0 0.0
  %89 = vmatprep.subr.mxu0 0.0
  %90 = vmatpush1.msra.mxu0 0.0
  %91 = vmatprep.subr.mxu0 0.0
  %92 = vmatpush1.msra.mxu0 0.0
  %93 = vmatprep.subr.mxu0 0.0
  %94 = vmatpush1.msra.mxu0 0.0
  %95 = vmatprep.subr.mxu0 0.0
  %96 = vmatpush1.msra.mxu0 0.0
  %97 = vmatprep.subr.mxu0 0.0
  %98 = vmatpush1.msra.mxu0 0.0
  %99 = vmatprep.subr.mxu0 0.0
  %100 = vmatpush1.msra.mxu0 0.0
  %101 = vmatprep.subr.mxu0 0.0
  %102 = vmatpush1.msra.mxu0 0.0
  %103 = vmatprep.subr.mxu0 0.0
  %104 = vmatpush1.msra.mxu0 0.0
  %105 = vmatprep.subr.mxu0 0.0
  %106 = vmatpush1.msra.mxu0 0.0
  %107 = vmatprep.mubr.f32.mxu0 0.0
  %108 = vmatmul.mubr.f32.gmra.mrb[0].mxu0 %v38
  %v109 = vpop.f32.mrb[0].mxu0
  %v110 = vadd.f32 %v35, %v109
  %v111 = vpop.f32.mrb[0].mxu0
  %112 = vmatprep.mubr.f32.mxu0 0.0
  %113 = vmatmul.mubr.f32.gmra.mrb[0].mxu0 %v41
  %v114 = vpop.f32.mrb[0].mxu0
  %v115 = vadd.f32 %v35, %v114
  %v116 = vpop.f32.mrb[0].mxu0
  %117 = vdwg.mxu0
  %v118 = vld [vmem:[%s1] sm:$0xff]
  %v119 = vlaneseq
  %v120 = vshrl.u32 %v119, 7
  %v121 = vsub.s32 0, %v120
  %v122 = vrot.slane %v29, %v121
  %v124 = vsel %vm36, %v118, 0
  %126 = vmatprep.subr.mxu0 0.0
  %127 = vmatpush1.msra.mxu0 %v24
  %128 = vmatprep.subr.mxu0 0.0
  %129 = vmatpush1.msra.mxu0 %v25
  %130 = vmatprep.subr.mxu0 0.0
  %131 = vmatpush1.msra.mxu0 %v26
  %132 = vmatprep.subr.mxu0 0.0
  %133 = vmatpush1.msra.mxu0 %v27
  %134 = vmatprep.subr.mxu0 0.0
  %135 = vmatpush1.msra.mxu0 0.0
  %136 = vmatprep.subr.mxu0 0.0
  %137 = vmatpush1.msra.mxu0 0.0
  %138 = vmatprep.subr.mxu0 0.0
  %139 = vmatpush1.msra.mxu0 0.0
  %140 = vmatprep.subr.mxu0 0.0
  %141 = vmatpush1.msra.mxu0 0.0
  %142 = vmatprep.subr.mxu0 0.0
  %143 = vmatpush1.msra.mxu0 0.0
  %144 = vmatprep.subr.mxu0 0.0
  %145 = vmatpush1.msra.mxu0 0.0
  %146 = vmatprep.subr.mxu0 0.0
  %147 = vmatpush1.msra.mxu0 0.0
  %148 = vmatprep.subr.mxu0 0.0
  %149 = vmatpush1.msra.mxu0 0.0
  %150 = vmatprep.subr.mxu0 0.0
  %151 = vmatpush1.msra.mxu0 0.0
  %152 = vmatprep.subr.mxu0 0.0
  %153 = vmatpush1.msra.mxu0 0.0
  %154 = vmatprep.subr.mxu0 0.0
  %155 = vmatpush1.msra.mxu0 0.0
  %156 = vmatprep.subr.mxu0 0.0
  %157 = vmatpush1.msra.mxu0 0.0
  %158 = vmatprep.subr.mxu0 0.0
  %159 = vmatpush1.msra.mxu0 0.0
  %160 = vmatprep.subr.mxu0 0.0
  %161 = vmatpush1.msra.mxu0 0.0
  %162 = vmatprep.subr.mxu0 0.0
  %163 = vmatpush1.msra.mxu0 0.0
  %164 = vmatprep.subr.mxu0 0.0
  %165 = vmatpush1.msra.mxu0 0.0
  %166 = vmatprep.subr.mxu0 0.0
  %167 = vmatpush1.msra.mxu0 0.0
  %168 = vmatprep.subr.mxu0 0.0
  %169 = vmatpush1.msra.mxu0 0.0
  %170 = vmatprep.subr.mxu0 0.0
  %171 = vmatpush1.msra.mxu0 0.0
  %172 = vmatprep.subr.mxu0 0.0
  %173 = vmatpush1.msra.mxu0 0.0
  %174 = vmatprep.subr.mxu0 0.0
  %175 = vmatpush1.msra.mxu0 0.0
  %176 = vmatprep.subr.mxu0 0.0
  %177 = vmatpush1.msra.mxu0 0.0
  %178 = vmatprep.subr.mxu0 0.0
  %179 = vmatpush1.msra.mxu0 0.0
  %180 = vmatprep.subr.mxu0 0.0
  %181 = vmatpush1.msra.mxu0 0.0
  %182 = vmatprep.subr.mxu0 0.0
  %183 = vmatpush1.msra.mxu0 0.0
  %184 = vmatprep.subr.mxu0 0.0
  %185 = vmatpush1.msra.mxu0 0.0
  %186 = vmatprep.subr.mxu0 0.0
  %187 = vmatpush1.msra.mxu0 0.0
  %188 = vmatprep.subr.mxu0 0.0
  %189 = vmatpush1.msra.mxu0 0.0
  %190 = vmatprep.mubr.f32.mxu0 0.0
  %191 = vmatmul.mubr.f32.gmra.mrb[0].mxu0 %v124
  %v192 = vpop.f32.mrb[0].mxu0
  %v193 = vadd.f32 %v122, %v192
  %v194 = vpop.f32.mrb[0].mxu0
  %195 = vdwg.mxu0
  %vm196 = vcmask 64512
  %v198 = vsel %vm196, %v110, 0
  %v201 = vsel %vm196, %v115, 0
  %v204 = vsel %vm196, %v193, 0
  %206 = vmatprep.subr.mxu0 0.0
  %207 = vmatpush1.xpose.msra.mxu0 %v204
  %208 = vmatprep.subr.mxu0 0.0
  %209 = vmatpush1.xpose.msra.mxu0 0.0
  %210 = vmatprep.subr.mxu0 0.0
  %211 = vmatpush1.xpose.msra.mxu0 0.0
  %212 = vmatprep.subr.mxu0 0.0
  %213 = vmatpush1.xpose.msra.mxu0 0.0
  %214 = vmatprep.subr.mxu0 0.0
  %215 = vmatpush1.xpose.msra.mxu0 0.0
  %216 = vmatprep.subr.mxu0 0.0
  %217 = vmatpush1.xpose.msra.mxu0 0.0
  %218 = vmatprep.subr.mxu0 0.0
  %219 = vmatpush1.xpose.msra.mxu0 0.0
  %220 = vmatprep.subr.mxu0 0.0
  %221 = vmatpush1.xpose.msra.mxu0 0.0
  %222 = vmatprep.subr.mxu0 0.0
  %223 = vmatpush1.xpose.msra.mxu0 0.0
  %224 = vmatprep.subr.mxu0 0.0
  %225 = vmatpush1.xpose.msra.mxu0 0.0
  %226 = vmatprep.subr.mxu0 0.0
  %227 = vmatpush1.xpose.msra.mxu0 0.0
  %228 = vmatprep.subr.mxu0 0.0
  %229 = vmatpush1.xpose.msra.mxu0 0.0
  %230 = vmatprep.subr.mxu0 0.0
  %231 = vmatpush1.xpose.msra.mxu0 0.0
  %232 = vmatprep.subr.mxu0 0.0
  %233 = vmatpush1.xpose.msra.mxu0 0.0
  %234 = vmatprep.subr.mxu0 0.0
  %235 = vmatpush1.xpose.msra.mxu0 0.0
  %236 = vmatprep.subr.mxu0 0.0
  %237 = vmatpush1.xpose.msra.mxu0 0.0
  %238 = vmatprep.subr.mxu0 0.0
  %239 = vmatpush1.xpose.msra.mxu0 0.0
  %240 = vmatprep.subr.mxu0 0.0
  %241 = vmatpush1.xpose.msra.mxu0 0.0
  %242 = vmatprep.subr.mxu0 0.0
  %243 = vmatpush1.xpose.msra.mxu0 0.0
  %244 = vmatprep.subr.mxu0 0.0
  %245 = vmatpush1.xpose.msra.mxu0 0.0
  %246 = vmatprep.subr.mxu0 0.0
  %247 = vmatpush1.xpose.msra.mxu0 0.0
  %248 = vmatprep.subr.mxu0 0.0
  %249 = vmatpush1.xpose.msra.mxu0 0.0
  %250 = vmatprep.subr.mxu0 0.0
  %251 = vmatpush1.xpose.msra.mxu0 0.0
  %252 = vmatprep.subr.mxu0 0.0
  %253 = vmatpush1.xpose.msra.mxu0 0.0
  %254 = vmatprep.subr.mxu0 0.0
  %255 = vmatpush1.xpose.msra.mxu0 0.0
  %256 = vmatprep.subr.mxu0 0.0
  %257 = vmatpush1.xpose.msra.mxu0 0.0
  %258 = vmatprep.subr.mxu0 0.0
  %259 = vmatpush1.xpose.msra.mxu0 0.0
  %260 = vmatprep.subr.mxu0 0.0
  %261 = vmatpush1.xpose.msra.mxu0 0.0
  %262 = vmatprep.subr.mxu0 0.0
  %263 = vmatpush1.xpose.msra.mxu0 0.0
  %264 = vmatprep.subr.mxu0 0.0
  %265 = vmatpush1.xpose.msra.mxu0 0.0
  %266 = vmatprep.subr.mxu0 0.0
  %267 = vmatpush1.xpose.msra.mxu0 0.0
  %268 = vmatprep.subr.mxu0 0.0
  %269 = vmatpush1.xpose.msra.mxu0 0.0
  %270 = vmatprep.mubr.f32.mxu0 0.0
  %271 = vmatmul.mubr.f32.gmra.mrb[0].mxu0 %v198
  %v272 = vpop.f32.mrb[0].mxu0
  %v273 = vadd.f32 0.0, %v272
  %v274 = vpop.f32.mrb[0].mxu0
  %275 = vmatprep.mubr.f32.mxu0 0.0
  %276 = vmatmul.mubr.f32.gmra.mrb[0].mxu0 %v201
  %v277 = vpop.f32.mrb[0].mxu0
  %v278 = vadd.f32 0.0, %v277
  %v279 = vpop.f32.mrb[0].mxu0
  %280 = vdwg.mxu0
  %v281 = vsel %vm196, %v273, -inf
  %282 = vmax.xlane.f32.xlu0 %v281
  %v283 = vpop.xlane.xlu0 %282
  %v284 = vsel %vm196, %v278, -inf
  %285 = vmax.xlane.f32.xlu0 %v284
  %v286 = vpop.xlane.xlu0 %285
  %v287 = vsub.f32 %v273, %v283
  %v288 = vsub.f32 %v278, %v286
  %v289 = vmul.f32 %v287, 1.442695
  %v290 = vpow.pop %v289
  %v291 = vmul.f32 %v288, 1.442695
  %v292 = vpow.pop %v291
  %v293 = vsel %vm196, %v290, 0.0
  %294 = vadd.xlane.f32.xlu0 %v293
  %v295 = vpop.xlane.xlu0 %294
  %v296 = vsel %vm196, %v292, 0.0
  %297 = vadd.xlane.f32.xlu0 %v296
  %v298 = vpop.xlane.xlu0 %297
  %v299 = vrcp.pop %v295
  %v300 = vrcp.pop %v298
  %v301 = vmul.f32 %v290, %v299
  %v302 = vmul.f32 %v292, %v300
  %v303 = vld [vmem:[%s2] sm:$0xff]
  %v304 = vld [vmem:[%s2 + $0x8] sm:$0xff]
  %v305 = vmul.f32 %v301, %v303
  %v306 = vmul.f32 %v302, %v304
  %307 = vst.msk [vmem:[%s5] sm:$0xff] %vm196, %v305
  %308 = vst.msk [vmem:[%s5 + $0x8] sm:$0xff] %vm196, %v306
  // Predicated region
  $region22: #{tpu_custom_call.1} parent=0 // pred_check
    _
  $region23: #{tpu_custom_call.1} parent=0 // pred_check_branch
    %310 = sbr.rel (0) target = $region25
  $region24: #{tpu_custom_call.1} parent=0 // pred_region
    _
  $region25: #{tpu_custom_call.1} parent=0 // pred_fallthru
    _
  // Predicated region
  $region26: #{tpu_custom_call.1} parent=0 // pred_check
    _
  $region27: #{tpu_custom_call.1} parent=0 // pred_check_branch
    %312 = sbr.rel (0) target = $region29
  $region28: #{tpu_custom_call.1} parent=0 // pred_region
    _
  $region29: #{tpu_custom_call.1} parent=0 // pred_fallthru
    _

</llo_original>
